<compile_context>
chip_gen: v7x
topology: tpu7x:2x2x1
jax: 0.10.0
libtpu: 0.0.40
codegen_flags: <defaults>
</compile_context>

<pallas_src>
import jax
import jax.numpy as jnp
from jax import lax
from jax.experimental import pallas as pl
from jax.experimental.pallas import tpu as pltpu


def _round_up(x: int, m: int) -> int:
    return (x + m - 1) // m * m


def _vmem_capacity_bytes() -> int:
    """Physical VMEM per TensorCore; conservative fallback = v7x's 64 MiB."""
    try:
        info = pltpu.get_tpu_info()
        cap = int(getattr(info, "vmem_capacity_bytes", 0) or 0)
        if cap > 0:
            return cap
    except Exception:
        pass
    return 64 * 1024 * 1024


def _num_tensorcores() -> int:
    """Best-effort TensorCores-per-chip (2 on v7x); safe fallback = 1."""
    try:
        dev = jax.devices()[0]
        for attr in ("num_cores", "core_count"):
            v = getattr(dev, attr, None)
            if v:
                return max(1, int(v))
    except Exception:
        pass
    return 1


def _pick_td(d_pad: int, cap: int) -> int:
    """Largest multiple-of-128 divisor of d_pad that is <= cap (min 128)."""
    best = 128
    t = 128
    while t <= d_pad:
        if d_pad % t == 0 and t <= cap:
            best = t
        t += 128
    return best


def _make_kernel(use_acc_scratch: bool, high_precision: bool):
    precision = lax.Precision.HIGHEST if high_precision else None

    def kernel(gid_ref, cnt_ref, nodes_ref, out_ref, *scratch):
        # grid = (D tiles [parallel], N tiles [arbitrary / reduction])
        acc_ref = scratch[0] if use_acc_scratch else out_ref
        n_step = pl.program_id(1)

        @pl.when(n_step == 0)
        def _init():
            acc_ref[...] = jnp.zeros_like(acc_ref)

        gid = gid_ref[...]                                   # (1, TN) int32, lane-dense
        b_pad = acc_ref.shape[0]
        tn = gid.shape[1]

        # One-hot membership built pre-transposed: one_hot[g, i] = (graph_id[i]==g).
        # Padded nodes carry graph_id == -1 and match nothing.
        graph_iota = lax.broadcasted_iota(jnp.int32, (b_pad, tn), 0)
        one_hot = (graph_iota == gid).astype(nodes_ref.dtype)    # (B_pad, TN)

        # graph_sum.index_add_(0, graph_id, nodes)  ==  one_hot @ nodes  (MXU)
        acc_ref[...] += lax.dot_general(
            one_hot, nodes_ref[...],
            dimension_numbers=(((1,), (0,)), ((), ())),
            preferred_element_type=jnp.float32,
            precision=precision,
        ).astype(acc_ref.dtype)

        @pl.when(n_step == pl.num_programs(1) - 1)
        def _finalize():
            # Exact divide (finalize is amortized over all N steps).
            # NOTE: empty graphs give count==0 -> inf/NaN, same hazard as PyTorch.
            cnt = cnt_ref[...]                                   # (B_pad, 1) f32
            out_ref[...] = (acc_ref[...].astype(jnp.float32) / cnt).astype(out_ref.dtype)

    return kernel


def mean_readout(nodes: jax.Array, graph_id: jax.Array,
                 num_graphs: int | None = None,
                 *, tn: int | None = None, td_max: int = 1024,
                 num_tensorcores: int | None = None) -> jax.Array:
    """Pallas equivalent of MeanReadout.forward(nodes, graph_id).

    Pass `num_graphs` (== max(graph_id)+1) statically to avoid a host sync.
    Callers passing num_graphs < max(graph_id)+1 silently drop those nodes.
    """
    if num_graphs is None:
        # Matches torch's int(torch.max(graph_id) + 1); forces a device sync.
        num_graphs = int(jax.device_get(jnp.max(graph_id))) + 1

    n, d = nodes.shape
    dtype = nodes.dtype
    itemsize = jnp.dtype(dtype).itemsize
    is_f32 = jnp.dtype(dtype) == jnp.float32

    # Dtype-aware sublane pack for the per-graph (row) axis.
    sub_pack = max(8, 32 // itemsize)
    b_pad = _round_up(num_graphs, sub_pack)

    # Feature tiles: td must divide d_pad = round_up(d, 128), so D is never
    # padded past lane alignment (no wasted HBM traffic / MXU work).
    d_pad = _round_up(d, 128)
    n_tc = num_tensorcores if num_tensorcores is not None else _num_tensorcores()
    td_cap = min(td_max, d_pad)
    if n_tc >= 2 and d_pad >= 256:
        # Ensure >=2 iterations on the "parallel" D axis so both TensorCores
        # (and both HBM paths) of a v7x chip are used.
        td_cap = min(td_cap, max(128, d_pad // 2))
    td = _pick_td(d_pad, td_cap)

    # Node tiles: big enough to amortize per-grid-step overhead (~4 MiB/tile),
    # capped by padded N and a hard max to bound pad waste / temporaries.
    n_cap = max(128, _round_up(n, 128))
    if tn is None:
        target_bytes = 4 * 1024 * 1024
        tn = _round_up(max(128, target_bytes // (td * itemsize)), 128)
    tn = max(128, min(_round_up(tn, 128), n_cap, 8192))

    use_acc_scratch = not is_f32   # f32 outputs accumulate directly in out_ref.

    vmem_cap = int(0.75 * _vmem_capacity_bytes())

    def vmem_needed(tn_: int) -> int:
        need = 2 * tn_ * td * itemsize          # double-buffered node tiles
        need += 2 * tn_ * 4                     # double-buffered gid tiles
        need += 2 * b_pad * 4                   # counts input buffers
        need += 2 * b_pad * td * itemsize       # output block buffers
        if use_acc_scratch:
            need += b_pad * td * 4              # f32 accumulator scratch
        need += b_pad * tn_ * (4 + itemsize)    # in-kernel iota / one-hot temps
        return need

    while vmem_needed(tn) * 5 // 4 > vmem_cap and tn > 256:
        tn = max(256, _round_up(tn // 2, 128))

    n_pad = _round_up(n, tn)
    nd_tiles = d_pad // td
    nn_tiles = n_pad // tn

    # Lane-dense graph ids; padded nodes get id -1 (match nothing).
    gid = graph_id.astype(jnp.int32).reshape(1, n)
    if n_pad != n:
        gid = jnp.pad(gid, ((0, 0), (0, n_pad - n)), constant_values=-1)
    nodes_p = nodes
    if n_pad != n or d_pad != d:
        nodes_p = jnp.pad(nodes, ((0, n_pad - n), (0, d_pad - d)))

    # Per-graph node counts precomputed once (tiny scatter-add over N ints):
    # removes the per-step (b_pad, tn) f32 one-hot copy and the redundant
    # re-count per D tile inside the kernel.
    counts = jnp.zeros((b_pad,), jnp.float32).at[graph_id].add(1.0)
    counts = counts.reshape(b_pad, 1)

    need = vmem_needed(tn)
    vmem_limit = int(min(vmem_cap, max(2 * need, 32 * 1024 * 1024)))

    cost = pl.CostEstimate(
        flops=2 * b_pad * n_pad * d_pad,
        transcendentals=0,
        bytes_accessed=(n_pad * d_pad * itemsize       # node features
                        + nd_tiles * n_pad * 4         # graph ids (per D tile)
                        + b_pad * d_pad * itemsize     # output
                        + b_pad * 4),                  # counts
    )

    scratch_shapes = ([pltpu.VMEM((b_pad, td), jnp.float32)]
                      if use_acc_scratch else [])

    out_pad = pl.pallas_call(
        _make_kernel(use_acc_scratch, high_precision=is_f32),
        out_shape=jax.ShapeDtypeStruct((b_pad, d_pad), dtype),
        grid=(nd_tiles, nn_tiles),
        in_specs=[
            pl.BlockSpec((1, tn), lambda dt, ns: (0, ns)),       # graph ids
            pl.BlockSpec((b_pad, 1), lambda dt, ns: (0, 0)),     # per-graph counts
            pl.BlockSpec((tn, td), lambda dt, ns: (ns, dt)),     # node feature tile
        ],
        out_specs=pl.BlockSpec((b_pad, td), lambda dt, ns: (0, dt)),
        scratch_shapes=scratch_shapes,
        compiler_params=pltpu.CompilerParams(
            dimension_semantics=("parallel", "arbitrary"),
            vmem_limit_bytes=vmem_limit,
        ),
        cost_estimate=cost,
    )(gid, counts, nodes_p)

    return out_pad[:num_graphs, :d]


def _reference(nodes, graph_id, num_graphs):
    """Pure-JAX reference mirroring the PyTorch module."""
    graph_sum = jnp.zeros((num_graphs, nodes.shape[1]), nodes.dtype)
    graph_dom = jnp.zeros((num_graphs,), jnp.int32)
    graph_sum = graph_sum.at[graph_id].add(nodes)
    graph_dom = graph_dom.at[graph_id].add(1)
    return graph_sum / graph_dom[:, None]


if __name__ == "__main__":
    key = jax.random.PRNGKey(0)
    k1, k2 = jax.random.split(key)

    N, D, B = 16, 32, 2          # 16 nodes, 32 features, 2 graphs
    nodes = jax.random.normal(k1, (N, D), dtype=jnp.float32)
    graph_id = jax.random.randint(k2, (N,), 0, B, dtype=jnp.int32)
    # guarantee both graphs are represented (avoid divide-by-zero like torch would)
    graph_id = graph_id.at[0].set(0).at[1].set(B - 1)

    # num_graphs passed statically -> no device_get sync in the wrapper.
    out = mean_readout(nodes, graph_id, num_graphs=B)
    jax.block_until_ready(out)

    ref = _reference(nodes, graph_id, B)
    assert out.shape == (B, D), out.shape
    # Exact divide + HIGHEST-precision f32 matmul -> tight tolerance now.
    assert jnp.allclose(out, ref, atol=1e-4, rtol=1e-4), "mismatch vs reference"

    print("KERNEL_OK")
</pallas_src>

<mosaic_0001>
module attributes {stable_mosaic.version = 11 : i64} {
  func.func @kernel(%arg0: i32, %arg1: i32, %arg2: memref<1x128xi32, #tpu.memory_space<vmem>>, %arg3: memref<8x1xf32, #tpu.memory_space<vmem>>, %arg4: memref<128x128xf32, #tpu.memory_space<vmem>>, %arg5: memref<8x128xf32, #tpu.memory_space<vmem>>) attributes {dimension_semantics = [#tpu.dimension_semantics<parallel>, #tpu.dimension_semantics<arbitrary>], iteration_bounds = array<i64: 1, 1>, scalar_prefetch = 0 : i64, scratch_operands = 0 : i64, tpu.core_type = #tpu.core_type<tc>, window_params = [{transform_indices = @transform_0, window_bounds = array<i64: 1, 128>}, {pipeline_mode = #tpu.pipeline_mode<synchronous>, transform_indices = @transform_1, window_bounds = array<i64: 8, 1>}, {transform_indices = @transform_2, window_bounds = array<i64: 128, 128>}, {transform_indices = @transform_3, window_bounds = array<i64: 8, 128>}]} {
    %c0_i32 = arith.constant 0 : i32
    %0 = arith.cmpi eq, %arg1, %c0_i32 : i32
    %1 = arith.extui %0 : i1 to i32
    %c0_i32_0 = arith.constant 0 : i32
    %2 = arith.cmpi ne, %1, %c0_i32_0 : i32
    scf.if %2 {
      %cst_10 = arith.constant 0.000000e+00 : f32
      %17 = vector.broadcast %cst_10 : f32 to vector<8x128xf32>
      %c0_11 = arith.constant 0 : index
      %c0_12 = arith.constant 0 : index
      %18 = vector.load %arg5[%c0_11, %c0_12] : memref<8x128xf32, #tpu.memory_space<vmem>>, vector<8x128xf32>
      tpu.vector_store %arg5[%c0_11, %c0_12], %17 {strides = array<i32>} : memref<8x128xf32, #tpu.memory_space<vmem>>, vector<8x128xf32>,
    } else {
    }
    %c0 = arith.constant 0 : index
    %c0_1 = arith.constant 0 : index
    %3 = vector.load %arg2[%c0, %c0_1] : memref<1x128xi32, #tpu.memory_space<vmem>>, vector<1x128xi32>
    %4 = tpu.iota {dimensions = array<i32: 0>} : vector<8x128xi32>
    %5 = vector.broadcast %3 : vector<1x128xi32> to vector<8x128xi32>
    %6 = arith.cmpi eq, %4, %5 : vector<8x128xi32>
    %7 = arith.extui %6 : vector<8x128xi1> to vector<8x128xi32>
    %8 = arith.sitofp %7 : vector<8x128xi32> to vector<8x128xf32>
    %c0_2 = arith.constant 0 : index
    %c0_3 = arith.constant 0 : index
    %9 = vector.load %arg5[%c0_2, %c0_3] : memref<8x128xf32, #tpu.memory_space<vmem>>, vector<8x128xf32>
    %c0_4 = arith.constant 0 : index
    %c0_5 = arith.constant 0 : index
    %10 = vector.load %arg4[%c0_4, %c0_5] : memref<128x128xf32, #tpu.memory_space<vmem>>, vector<128x128xf32>
    %cst = arith.constant dense<0.000000e+00> : vector<8x128xf32>
    %11 = tpu.matmul %8, %10, %cst {dimension_numbers = #tpu.dot_dimension_numbers<[1], [0], [0], [1], [0, 0, 1, 1], [], []>, precision = #tpu.contract_precision<fp32>} : vector<8x128xf32>, vector<128x128xf32>, vector<8x128xf32> -> vector<8x128xf32>
    %12 = arith.addf %9, %11 : vector<8x128xf32>
    %c0_6 = arith.constant 0 : index
    %c0_7 = arith.constant 0 : index
    %13 = vector.load %arg5[%c0_6, %c0_7] : memref<8x128xf32, #tpu.memory_space<vmem>>, vector<8x128xf32>
    tpu.vector_store %arg5[%c0_6, %c0_7], %12 {strides = array<i32>} : memref<8x128xf32, #tpu.memory_space<vmem>>, vector<8x128xf32>,
    %c0_i32_8 = arith.constant 0 : i32
    %14 = arith.cmpi eq, %arg1, %c0_i32_8 : i32
    %15 = arith.extui %14 : i1 to i32
    %c0_i32_9 = arith.constant 0 : i32
    %16 = arith.cmpi ne, %15, %c0_i32_9 : i32
    scf.if %16 {
      %c0_10 = arith.constant 0 : index
      %c0_11 = arith.constant 0 : index
      %17 = vector.load %arg3[%c0_10, %c0_11] : memref<8x1xf32, #tpu.memory_space<vmem>>, vector<8x1xf32>
      %c0_12 = arith.constant 0 : index
      %c0_13 = arith.constant 0 : index
      %18 = vector.load %arg5[%c0_12, %c0_13] : memref<8x128xf32, #tpu.memory_space<vmem>>, vector<8x128xf32>
      %19 = vector.broadcast %17 : vector<8x1xf32> to vector<8x128xf32>
      %20 = arith.divf %18, %19 : vector<8x128xf32>
      %c0_14 = arith.constant 0 : index
      %c0_15 = arith.constant 0 : index
      %21 = vector.load %arg5[%c0_14, %c0_15] : memref<8x128xf32, #tpu.memory_space<vmem>>, vector<8x128xf32>
      tpu.vector_store %arg5[%c0_14, %c0_15], %20 {strides = array<i32>} : memref<8x128xf32, #tpu.memory_space<vmem>>, vector<8x128xf32>,
    } else {
    }
    return
  }
  func.func @transform_0(%arg0: i32, %arg1: i32) -> (i32, i32) {
    %c0_i32 = arith.constant 0 : i32
    %c0_i32_0 = arith.constant 0 : i32
    return %c0_i32, %arg1 : i32, i32
  }
  func.func @transform_1(%arg0: i32, %arg1: i32) -> (i32, i32) {
    %c0_i32 = arith.constant 0 : i32
    %c0_i32_0 = arith.constant 0 : i32
    %c0_i32_1 = arith.constant 0 : i32
    return %c0_i32, %c0_i32_0 : i32, i32
  }
  func.func @transform_2(%arg0: i32, %arg1: i32) -> (i32, i32) {
    %c0_i32 = arith.constant 0 : i32
    return %arg1, %arg0 : i32, i32
  }
  func.func @transform_3(%arg0: i32, %arg1: i32) -> (i32, i32) {
    %c0_i32 = arith.constant 0 : i32
    %c0_i32_0 = arith.constant 0 : i32
    return %c0_i32, %arg0 : i32, i32
  }
}

</mosaic_0001>

<llo_original>
// kernel: tpu_custom_call.1
$region0: #{tpu_custom_call.1}
  #allocation0 [shape = 'u32[]', space=smem, size = 0x4, offset = 0x4, fixed_abs, tag = 'smem constant byte address 0x4 - core index']
  #allocation1 [shape = 'u32[144,128]{1,0:T(1,128)}', space=vmem, size = 0x12000, scoped, tag = 'internal scratch']
  %s0 = inlined_call_operand.vmem [shape: s32[1,128], index: 0, kind: input, shape index: {}]
  %s1 = inlined_call_operand.vmem [shape: f32[8,1], index: 1, kind: input, shape index: {}]
  %s2 = inlined_call_operand.hbm [shape: f32[128,128], index: 2, kind: input, shape index: {}]
  %s3 = inlined_call_operand.hbm [shape: f32[8,128], index: 3, kind: output, shape index: {}]
  %s4 = sld [smem:[#allocation0]]
  $region34: #{tpu_custom_call.1} parent=0
    _
  %s6 = ssub.s32 1, %s4
  %s7 = scalar_select 0, %s6, %s4
  $region1: #{tpu_custom_call.1} parent=0
    #allocation2 [shape = 'u8[65536]{0}', space=vmem, size = 0x10000, scoped, tag = 'input window, operand 2, single buffered']
    #allocation3 [shape = 's32[1]{0}', space=sflag, size = 0x4, scoped, tag = 'scoped memory for tpu_custom_call.1']
    #allocation4 [shape = 's32[1]{0}', space=sflag, size = 0x4, scoped, tag = 'scoped memory for tpu_custom_call.1']
    #allocation5 [shape = 'u8[4096]{0}', space=vmem, size = 0x1000, scoped, tag = 'output window, operand 0, single buffered']
    %8 = vsyncpa [#allocation3], 0
    %9 = vsyncpa [#allocation4], 0
    // Predicated region
    $region2: #{tpu_custom_call.1} parent=1 // pred_check
      _
    $region3: #{tpu_custom_call.1} parent=1 // pred_check_branch
      %11 = sbr.rel (0) target = $region5
    $region4: #{tpu_custom_call.1} parent=1 // pred_region
      _
    $region5: #{tpu_custom_call.1} parent=1 // pred_fallthru
      _
    // Predicated region
    $region6: #{tpu_custom_call.1} parent=1 // pred_check
      _
    $region7: #{tpu_custom_call.1} parent=1 // pred_check_branch
      %13 = sbr.rel (0) target = $region9
    $region8: #{tpu_custom_call.1} parent=1 // pred_region
      _
    $region9: #{tpu_custom_call.1} parent=1 // pred_fallthru
      _
    // Predicated region
    $region10: #{tpu_custom_call.1} parent=1 // pred_check
      _
    $region11: #{tpu_custom_call.1} parent=1 // pred_check_branch
      %15 = sbr.rel (0) target = $region13
    $region12: #{tpu_custom_call.1} parent=1 // pred_region
      %s17 = ssub.s32 2048, 2048
      %18 = vsyncadd [#allocation3], %s17
      %s19 = sshll.u32 [#allocation2], 4
      %s20 = int_to_ptr.vmem [resolvable:$true] %s19
      %25 = dma.hbm_to_vmem [thread:$0]  %s2, 2048, %s20, [#allocation3], 128, 128, 8
    $region13: #{tpu_custom_call.1} parent=1 // pred_fallthru
      _
    // Predicated region
    $region14: #{tpu_custom_call.1} parent=1 // pred_check
      _
    $region15: #{tpu_custom_call.1} parent=1 // pred_check_branch
      %27 = sbr.rel (0) target = $region17
    $region16: #{tpu_custom_call.1} parent=1 // pred_region
      %28 = dma.done [#allocation3], 2048
    $region17: #{tpu_custom_call.1} parent=1 // pred_fallthru
      _
    %p29 = scmp.eq.s32.totalorder 0, 0
    // Predicated region
    $region18: #{tpu_custom_call.1} parent=1 // pred_check
      %p30 = pneg %p29
    $region19: #{tpu_custom_call.1} parent=1 // pred_check_branch
      %32 = sbr.rel (%p30) target = $region21
    $region20: #{tpu_custom_call.1} parent=1 // pred_region
      %33 = vst [vmem:[#allocation5] sm:$0xff] 0.0
    $region21: #{tpu_custom_call.1} parent=1 // pred_fallthru
      _
    %v34 = vld [vmem:[%s0] sm:$0x1]
    %v35 = vlaneseq
    %v36 = vshrl.u32 %v35, 7
    %v37 = vlaneseq
    %v38 = vshrl.u32 %v37, 7
    %v39 = vsub.s32 0, %v38
    %v40 = vrot.slane %v34, %v39
    %vm41 = vcmp.eq.s32.totalorder %v36, %v40
    %v42 = vsel %vm41, 1, 0
    %v43 = vcvt.s32.f32 %v42
    %v44 = vld [vmem:[#allocation5] sm:$0xff]
    %v45 = vld [vmem:[#allocation2] sm:$0xff]
    %v46 = vld [vmem:[#allocation2 + $0x8] sm:$0xff]
    %v47 = vld [vmem:[#allocation2 + $0x10] sm:$0xff]
    %v48 = vld [vmem:[#allocation2 + $0x18] sm:$0xff]
    %v49 = vld [vmem:[#allocation2 + $0x20] sm:$0xff]
    %v50 = vld [vmem:[#allocation2 + $0x28] sm:$0xff]
    %v51 = vld [vmem:[#allocation2 + $0x30] sm:$0xff]
    %v52 = vld [vmem:[#allocation2 + $0x38] sm:$0xff]
    %v53 = vld [vmem:[#allocation2 + $0x40] sm:$0xff]
    %v54 = vld [vmem:[#allocation2 + $0x48] sm:$0xff]
    %v55 = vld [vmem:[#allocation2 + $0x50] sm:$0xff]
    %v56 = vld [vmem:[#allocation2 + $0x58] sm:$0xff]
    %v57 = vld [vmem:[#allocation2 + $0x60] sm:$0xff]
    %v58 = vld [vmem:[#allocation2 + $0x68] sm:$0xff]
    %v59 = vld [vmem:[#allocation2 + $0x70] sm:$0xff]
    %v60 = vld [vmem:[#allocation2 + $0x78] sm:$0xff]
    %61 = vmatprep.subr.mxu0 0.0
    %v62 = vand.u32 %v45, 4294901760
    %63 = vmatpush1.msra.mxu0 %v62
    %64 = vmatprep.subr.mxu0 0.0
    %v65 = vand.u32 %v46, 4294901760
    %66 = vmatpush1.msra.mxu0 %v65
    %67 = vmatprep.subr.mxu0 0.0
    %v68 = vand.u32 %v47, 4294901760
    %69 = vmatpush1.msra.mxu0 %v68
    %70 = vmatprep.subr.mxu0 0.0
    %v71 = vand.u32 %v48, 4294901760
    %72 = vmatpush1.msra.mxu0 %v71
    %73 = vmatprep.subr.mxu0 0.0
    %v74 = vand.u32 %v49, 4294901760
    %75 = vmatpush1.msra.mxu0 %v74
    %76 = vmatprep.subr.mxu0 0.0
    %v77 = vand.u32 %v50, 4294901760
    %78 = vmatpush1.msra.mxu0 %v77
    %79 = vmatprep.subr.mxu0 0.0
    %v80 = vand.u32 %v51, 4294901760
    %81 = vmatpush1.msra.mxu0 %v80
    %82 = vmatprep.subr.mxu0 0.0
    %v83 = vand.u32 %v52, 4294901760
    %84 = vmatpush1.msra.mxu0 %v83
    %85 = vmatprep.subr.mxu0 0.0
    %v86 = vand.u32 %v53, 4294901760
    %87 = vmatpush1.msra.mxu0 %v86
    %88 = vmatprep.subr.mxu0 0.0
    %v89 = vand.u32 %v54, 4294901760
    %90 = vmatpush1.msra.mxu0 %v89
    %91 = vmatprep.subr.mxu0 0.0
    %v92 = vand.u32 %v55, 4294901760
    %93 = vmatpush1.msra.mxu0 %v92
    %94 = vmatprep.subr.mxu0 0.0
    %v95 = vand.u32 %v56, 4294901760
    %96 = vmatpush1.msra.mxu0 %v95
    %97 = vmatprep.subr.mxu0 0.0
    %v98 = vand.u32 %v57, 4294901760
    %99 = vmatpush1.msra.mxu0 %v98
    %100 = vmatprep.subr.mxu0 0.0
    %v101 = vand.u32 %v58, 4294901760
    %102 = vmatpush1.msra.mxu0 %v101
    %103 = vmatprep.subr.mxu0 0.0
    %v104 = vand.u32 %v59, 4294901760
    %105 = vmatpush1.msra.mxu0 %v104
    %106 = vmatprep.subr.mxu0 0.0
    %v107 = vand.u32 %v60, 4294901760
    %108 = vmatpush1.msra.mxu0 %v107
    %109 = vmatprep.subr.mxu0 0.0
    %110 = vmatpush1.msra.mxu0 0.0
    %111 = vmatprep.subr.mxu0 0.0
    %112 = vmatpush1.msra.mxu0 0.0
    %113 = vmatprep.subr.mxu0 0.0
    %114 = vmatpush1.msra.mxu0 0.0
    %115 = vmatprep.subr.mxu0 0.0
    %116 = vmatpush1.msra.mxu0 0.0
    %117 = vmatprep.subr.mxu0 0.0
    %118 = vmatpush1.msra.mxu0 0.0
    %119 = vmatprep.subr.mxu0 0.0
    %120 = vmatpush1.msra.mxu0 0.0
    %121 = vmatprep.subr.mxu0 0.0
    %122 = vmatpush1.msra.mxu0 0.0
    %123 = vmatprep.subr.mxu0 0.0
    %124 = vmatpush1.msra.mxu0 0.0
    %125 = vmatprep.subr.mxu0 0.0
    %126 = vmatpush1.msra.mxu0 0.0
    %127 = vmatprep.subr.mxu0 0.0
    %128 = vmatpush1.msra.mxu0 0.0
    %129 = vmatprep.subr.mxu0 0.0
    %130 = vmatpush1.msra.mxu0 0.0
    %131 = vmatprep.subr.mxu0 0.0
    %132 = vmatpush1.msra.mxu0 0.0
    %133 = vmatprep.subr.mxu0 0.0
    %134 = vmatpush1.msra.mxu0 0.0
    %135 = vmatprep.subr.mxu0 0.0
    %136 = vmatpush1.msra.mxu0 0.0
    %137 = vmatprep.subr.mxu0 0.0
    %138 = vmatpush1.msra.mxu0 0.0
    %139 = vmatprep.subr.mxu0 0.0
    %140 = vmatpush1.msra.mxu0 0.0
    %141 = vmatprep.mubr.f32.mxu0 0.0
    %v142 = vand.u32 %v43, 4294901760
    %v143 = vsub.f32 %v43, %v142
    %v144 = vand.u32 %v143, 4294901760
    %v145 = vsub.f32 %v143, %v144
    %v146 = vand.u32 %v145, 4294901760
    %147 = vmatmul.mubr.f32.gmra.mrb[0].mxu0 %v146
    %v148 = vpop.f32.mrb[0].mxu0
    %v149 = vadd.f32 0.0, %v148
    %v150 = vpop.f32.mrb[0].mxu0
    %151 = vdwg.mxu0
    %152 = vmatprep.subr.mxu0 0.0
    %v153 = vand.u32 %v45, 4294901760
    %v154 = vsub.f32 %v45, %v153
    %v155 = vand.u32 %v154, 4294901760
    %v156 = vsub.f32 %v154, %v155
    %v157 = vand.u32 %v156, 4294901760
    %158 = vmatpush1.msra.mxu0 %v157
    %159 = vmatprep.subr.mxu0 0.0
    %v160 = vand.u32 %v46, 4294901760
    %v161 = vsub.f32 %v46, %v160
    %v162 = vand.u32 %v161, 4294901760
    %v163 = vsub.f32 %v161, %v162
    %v164 = vand.u32 %v163, 4294901760
    %165 = vmatpush1.msra.mxu0 %v164
    %166 = vmatprep.subr.mxu0 0.0
    %v167 = vand.u32 %v47, 4294901760
    %v168 = vsub.f32 %v47, %v167
    %v169 = vand.u32 %v168, 4294901760
    %v170 = vsub.f32 %v168, %v169
    %v171 = vand.u32 %v170, 4294901760
    %172 = vmatpush1.msra.mxu0 %v171
    %173 = vmatprep.subr.mxu0 0.0
    %v174 = vand.u32 %v48, 4294901760
    %v175 = vsub.f32 %v48, %v174
    %v176 = vand.u32 %v175, 4294901760
    %v177 = vsub.f32 %v175, %v176
    %v178 = vand.u32 %v177, 4294901760
    %179 = vmatpush1.msra.mxu0 %v178
    %180 = vmatprep.subr.mxu0 0.0
    %v181 = vand.u32 %v49, 4294901760
    %v182 = vsub.f32 %v49, %v181
    %v183 = vand.u32 %v182, 4294901760
    %v184 = vsub.f32 %v182, %v183
    %v185 = vand.u32 %v184, 4294901760
    %186 = vmatpush1.msra.mxu0 %v185
    %187 = vmatprep.subr.mxu0 0.0
    %v188 = vand.u32 %v50, 4294901760
    %v189 = vsub.f32 %v50, %v188
    %v190 = vand.u32 %v189, 4294901760
    %v191 = vsub.f32 %v189, %v190
    %v192 = vand.u32 %v191, 4294901760
    %193 = vmatpush1.msra.mxu0 %v192
    %194 = vmatprep.subr.mxu0 0.0
    %v195 = vand.u32 %v51, 4294901760
    %v196 = vsub.f32 %v51, %v195
    %v197 = vand.u32 %v196, 4294901760
    %v198 = vsub.f32 %v196, %v197
    %v199 = vand.u32 %v198, 4294901760
    %200 = vmatpush1.msra.mxu0 %v199
    %201 = vmatprep.subr.mxu0 0.0
    %v202 = vand.u32 %v52, 4294901760
    %v203 = vsub.f32 %v52, %v202
    %v204 = vand.u32 %v203, 4294901760
    %v205 = vsub.f32 %v203, %v204
    %v206 = vand.u32 %v205, 4294901760
    %207 = vmatpush1.msra.mxu0 %v206
    %208 = vmatprep.subr.mxu0 0.0
    %v209 = vand.u32 %v53, 4294901760
    %v210 = vsub.f32 %v53, %v209
    %v211 = vand.u32 %v210, 4294901760
    %v212 = vsub.f32 %v210, %v211
    %v213 = vand.u32 %v212, 4294901760
    %214 = vmatpush1.msra.mxu0 %v213
    %215 = vmatprep.subr.mxu0 0.0
    %v216 = vand.u32 %v54, 4294901760
    %v217 = vsub.f32 %v54, %v216
    %v218 = vand.u32 %v217, 4294901760
    %v219 = vsub.f32 %v217, %v218
    %v220 = vand.u32 %v219, 4294901760
    %221 = vmatpush1.msra.mxu0 %v220
    %222 = vmatprep.subr.mxu0 0.0
    %v223 = vand.u32 %v55, 4294901760
    %v224 = vsub.f32 %v55, %v223
    %v225 = vand.u32 %v224, 4294901760
    %v226 = vsub.f32 %v224, %v225
    %v227 = vand.u32 %v226, 4294901760
    %228 = vmatpush1.msra.mxu0 %v227
    %229 = vmatprep.subr.mxu0 0.0
    %v230 = vand.u32 %v56, 4294901760
    %v231 = vsub.f32 %v56, %v230
    %v232 = vand.u32 %v231, 4294901760
    %v233 = vsub.f32 %v231, %v232
    %v234 = vand.u32 %v233, 4294901760
    %235 = vmatpush1.msra.mxu0 %v234
    %236 = vmatprep.subr.mxu0 0.0
    %v237 = vand.u32 %v57, 4294901760
    %v238 = vsub.f32 %v57, %v237
    %v239 = vand.u32 %v238, 4294901760
    %v240 = vsub.f32 %v238, %v239
    %v241 = vand.u32 %v240, 4294901760
    %242 = vmatpush1.msra.mxu0 %v241
    %243 = vmatprep.subr.mxu0 0.0
    %v244 = vand.u32 %v58, 4294901760
    %v245 = vsub.f32 %v58, %v244
    %v246 = vand.u32 %v245, 4294901760
    %v247 = vsub.f32 %v245, %v246
    %v248 = vand.u32 %v247, 4294901760
    %249 = vmatpush1.msra.mxu0 %v248
    %250 = vmatprep.subr.mxu0 0.0
    %v251 = vand.u32 %v59, 4294901760
    %v252 = vsub.f32 %v59, %v251
    %v253 = vand.u32 %v252, 4294901760
    %v254 = vsub.f32 %v252, %v253
    %v255 = vand.u32 %v254, 4294901760
    %256 = vmatpush1.msra.mxu0 %v255
    %257 = vmatprep.subr.mxu0 0.0
    %v258 = vand.u32 %v60, 4294901760
    %v259 = vsub.f32 %v60, %v258
    %v260 = vand.u32 %v259, 4294901760
    %v261 = vsub.f32 %v259, %v260
    %v262 = vand.u32 %v261, 4294901760
    %263 = vmatpush1.msra.mxu0 %v262
    %264 = vmatprep.subr.mxu0 0.0
    %265 = vmatpush1.msra.mxu0 0.0
    %266 = vmatprep.subr.mxu0 0.0
    %267 = vmatpush1.msra.mxu0 0.0
    %268 = vmatprep.subr.mxu0 0.0
    %269 = vmatpush1.msra.mxu0 0.0
    %270 = vmatprep.subr.mxu0 0.0
    %271 = vmatpush1.msra.mxu0 0.0
    %272 = vmatprep.subr.mxu0 0.0
    %273 = vmatpush1.msra.mxu0 0.0
    %274 = vmatprep.subr.mxu0 0.0
    %275 = vmatpush1.msra.mxu0 0.0
    %276 = vmatprep.subr.mxu0 0.0
    %277 = vmatpush1.msra.mxu0 0.0
    %278 = vmatprep.subr.mxu0 0.0
    %279 = vmatpush1.msra.mxu0 0.0
    %280 = vmatprep.subr.mxu0 0.0
    %281 = vmatpush1.msra.mxu0 0.0
    %282 = vmatprep.subr.mxu0 0.0
    %283 = vmatpush1.msra.mxu0 0.0
    %284 = vmatprep.subr.mxu0 0.0
    %285 = vmatpush1.msra.mxu0 0.0
    %286 = vmatprep.subr.mxu0 0.0
    %287 = vmatpush1.msra.mxu0 0.0
    %288 = vmatprep.subr.mxu0 0.0
    %289 = vmatpush1.msra.mxu0 0.0
    %290 = vmatprep.subr.mxu0 0.0
    %291 = vmatpush1.msra.mxu0 0.0
    %292 = vmatprep.subr.mxu0 0.0
    %293 = vmatpush1.msra.mxu0 0.0
    %294 = vmatprep.subr.mxu0 0.0
    %295 = vmatpush1.msra.mxu0 0.0
    %296 = vmatprep.mubr.f32.mxu0 0.0
    %v297 = vand.u32 %v43, 4294901760
    %298 = vmatmul.mubr.f32.gmra.mrb[0].mxu0 %v297
    %v299 = vpop.f32.mrb[0].mxu0
    %v300 = vadd.f32 %v149, %v299
    %v301 = vpop.f32.mrb[0].mxu0
    %302 = vdwg.mxu0
    %303 = vmatprep.subr.mxu0 0.0
    %v304 = vand.u32 %v45, 4294901760
    %v305 = vsub.f32 %v45, %v304
    %306 = vmatpush1.msra.mxu0 %v305
    %307 = vmatprep.subr.mxu0 0.0
    %v308 = vand.u32 %v46, 4294901760
    %v309 = vsub.f32 %v46, %v308
    %310 = vmatpush1.msra.mxu0 %v309
    %311 = vmatprep.subr.mxu0 0.0
    %v312 = vand.u32 %v47, 4294901760
    %v313 = vsub.f32 %v47, %v312
    %314 = vmatpush1.msra.mxu0 %v313
    %315 = vmatprep.subr.mxu0 0.0
    %v316 = vand.u32 %v48, 4294901760
    %v317 = vsub.f32 %v48, %v316
    %318 = vmatpush1.msra.mxu0 %v317
    %319 = vmatprep.subr.mxu0 0.0
    %v320 = vand.u32 %v49, 4294901760
    %v321 = vsub.f32 %v49, %v320
    %322 = vmatpush1.msra.mxu0 %v321
    %323 = vmatprep.subr.mxu0 0.0
    %v324 = vand.u32 %v50, 4294901760
    %v325 = vsub.f32 %v50, %v324
    %326 = vmatpush1.msra.mxu0 %v325
    %327 = vmatprep.subr.mxu0 0.0
    %v328 = vand.u32 %v51, 4294901760
    %v329 = vsub.f32 %v51, %v328
    %330 = vmatpush1.msra.mxu0 %v329
    %331 = vmatprep.subr.mxu0 0.0
    %v332 = vand.u32 %v52, 4294901760
    %v333 = vsub.f32 %v52, %v332
    %334 = vmatpush1.msra.mxu0 %v333
    %335 = vmatprep.subr.mxu0 0.0
    %v336 = vand.u32 %v53, 4294901760
    %v337 = vsub.f32 %v53, %v336
    %338 = vmatpush1.msra.mxu0 %v337
    %339 = vmatprep.subr.mxu0 0.0
    %v340 = vand.u32 %v54, 4294901760
    %v341 = vsub.f32 %v54, %v340
    %342 = vmatpush1.msra.mxu0 %v341
    %343 = vmatprep.subr.mxu0 0.0
    %v344 = vand.u32 %v55, 4294901760
    %v345 = vsub.f32 %v55, %v344
    %346 = vmatpush1.msra.mxu0 %v345
    %347 = vmatprep.subr.mxu0 0.0
    %v348 = vand.u32 %v56, 4294901760
    %v349 = vsub.f32 %v56, %v348
    %350 = vmatpush1.msra.mxu0 %v349
    %351 = vmatprep.subr.mxu0 0.0
    %v352 = vand.u32 %v57, 4294901760
    %v353 = vsub.f32 %v57, %v352
    %354 = vmatpush1.msra.mxu0 %v353
    %355 = vmatprep.subr.mxu0 0.0
    %v356 = vand.u32 %v58, 4294901760
    %v357 = vsub.f32 %v58, %v356
    %358 = vmatpush1.msra.mxu0 %v357
    %359 = vmatprep.subr.mxu0 0.0
    %v360 = vand.u32 %v59, 4294901760
    %v361 = vsub.f32 %v59, %v360
    %362 = vmatpush1.msra.mxu0 %v361
    %363 = vmatprep.subr.mxu0 0.0
    %v364 = vand.u32 %v60, 4294901760
    %v365 = vsub.f32 %v60, %v364
    %366 = vmatpush1.msra.mxu0 %v365
    %367 = vmatprep.subr.mxu0 0.0
    %368 = vmatpush1.msra.mxu0 0.0
    %369 = vmatprep.subr.mxu0 0.0
    %370 = vmatpush1.msra.mxu0 0.0
    %371 = vmatprep.subr.mxu0 0.0
    %372 = vmatpush1.msra.mxu0 0.0
    %373 = vmatprep.subr.mxu0 0.0
    %374 = vmatpush1.msra.mxu0 0.0
    %375 = vmatprep.subr.mxu0 0.0
    %376 = vmatpush1.msra.mxu0 0.0
    %377 = vmatprep.subr.mxu0 0.0
    %378 = vmatpush1.msra.mxu0 0.0
    %379 = vmatprep.subr.mxu0 0.0
    %380 = vmatpush1.msra.mxu0 0.0
    %381 = vmatprep.subr.mxu0 0.0
    %382 = vmatpush1.msra.mxu0 0.0
    %383 = vmatprep.subr.mxu0 0.0
    %384 = vmatpush1.msra.mxu0 0.0
    %385 = vmatprep.subr.mxu0 0.0
    %386 = vmatpush1.msra.mxu0 0.0
    %387 = vmatprep.subr.mxu0 0.0
    %388 = vmatpush1.msra.mxu0 0.0
    %389 = vmatprep.subr.mxu0 0.0
    %390 = vmatpush1.msra.mxu0 0.0
    %391 = vmatprep.subr.mxu0 0.0
    %392 = vmatpush1.msra.mxu0 0.0
    %393 = vmatprep.subr.mxu0 0.0
    %394 = vmatpush1.msra.mxu0 0.0
    %395 = vmatprep.subr.mxu0 0.0
    %396 = vmatpush1.msra.mxu0 0.0
    %397 = vmatprep.subr.mxu0 0.0
    %398 = vmatpush1.msra.mxu0 0.0
    %399 = vmatprep.mubr.f32.mxu0 0.0
    %v400 = vand.u32 %v43, 4294901760
    %v401 = vsub.f32 %v43, %v400
    %402 = vmatmul.mubr.f32.gmra.mrb[0].mxu0 %v401
    %v403 = vpop.f32.mrb[0].mxu0
    %v404 = vadd.f32 %v300, %v403
    %v405 = vpop.f32.mrb[0].mxu0
    %406 = vdwg.mxu0
    %407 = vmatprep.subr.mxu0 0.0
    %v408 = vand.u32 %v45, 4294901760
    %409 = vmatpush1.msra.mxu0 %v408
    %410 = vmatprep.subr.mxu0 0.0
    %v411 = vand.u32 %v46, 4294901760
    %412 = vmatpush1.msra.mxu0 %v411
    %413 = vmatprep.subr.mxu0 0.0
    %v414 = vand.u32 %v47, 4294901760
    %415 = vmatpush1.msra.mxu0 %v414
    %416 = vmatprep.subr.mxu0 0.0
    %v417 = vand.u32 %v48, 4294901760
    %418 = vmatpush1.msra.mxu0 %v417
    %419 = vmatprep.subr.mxu0 0.0
    %v420 = vand.u32 %v49, 4294901760
    %421 = vmatpush1.msra.mxu0 %v420
    %422 = vmatprep.subr.mxu0 0.0
    %v423 = vand.u32 %v50, 4294901760
    %424 = vmatpush1.msra.mxu0 %v423
    %425 = vmatprep.subr.mxu0 0.0
    %v426 = vand.u32 %v51, 4294901760
    %427 = vmatpush1.msra.mxu0 %v426
    %428 = vmatprep.subr.mxu0 0.0
    %v429 = vand.u32 %v52, 4294901760
    %430 = vmatpush1.msra.mxu0 %v429
    %431 = vmatprep.subr.mxu0 0.0
    %v432 = vand.u32 %v53, 4294901760
    %433 = vmatpush1.msra.mxu0 %v432
    %434 = vmatprep.subr.mxu0 0.0
    %v435 = vand.u32 %v54, 4294901760
    %436 = vmatpush1.msra.mxu0 %v435
    %437 = vmatprep.subr.mxu0 0.0
    %v438 = vand.u32 %v55, 4294901760
    %439 = vmatpush1.msra.mxu0 %v438
    %440 = vmatprep.subr.mxu0 0.0
    %v441 = vand.u32 %v56, 4294901760
    %442 = vmatpush1.msra.mxu0 %v441
    %443 = vmatprep.subr.mxu0 0.0
    %v444 = vand.u32 %v57, 4294901760
    %445 = vmatpush1.msra.mxu0 %v444
    %446 = vmatprep.subr.mxu0 0.0
    %v447 = vand.u32 %v58, 4294901760
    %448 = vmatpush1.msra.mxu0 %v447
    %449 = vmatprep.subr.mxu0 0.0
    %v450 = vand.u32 %v59, 4294901760
    %451 = vmatpush1.msra.mxu0 %v450
    %452 = vmatprep.subr.mxu0 0.0
    %v453 = vand.u32 %v60, 4294901760
    %454 = vmatpush1.msra.mxu0 %v453
    %455 = vmatprep.subr.mxu0 0.0
    %456 = vmatpush1.msra.mxu0 0.0
    %457 = vmatprep.subr.mxu0 0.0
    %458 = vmatpush1.msra.mxu0 0.0
    %459 = vmatprep.subr.mxu0 0.0
    %460 = vmatpush1.msra.mxu0 0.0
    %461 = vmatprep.subr.mxu0 0.0
    %462 = vmatpush1.msra.mxu0 0.0
    %463 = vmatprep.subr.mxu0 0.0
    %464 = vmatpush1.msra.mxu0 0.0
    %465 = vmatprep.subr.mxu0 0.0
    %466 = vmatpush1.msra.mxu0 0.0
    %467 = vmatprep.subr.mxu0 0.0
    %468 = vmatpush1.msra.mxu0 0.0
    %469 = vmatprep.subr.mxu0 0.0
    %470 = vmatpush1.msra.mxu0 0.0
    %471 = vmatprep.subr.mxu0 0.0
    %472 = vmatpush1.msra.mxu0 0.0
    %473 = vmatprep.subr.mxu0 0.0
    %474 = vmatpush1.msra.mxu0 0.0
    %475 = vmatprep.subr.mxu0 0.0
    %476 = vmatpush1.msra.mxu0 0.0
    %477 = vmatprep.subr.mxu0 0.0
    %478 = vmatpush1.msra.mxu0 0.0
    %479 = vmatprep.subr.mxu0 0.0
    %480 = vmatpush1.msra.mxu0 0.0
    %481 = vmatprep.subr.mxu0 0.0
    %482 = vmatpush1.msra.mxu0 0.0
    %483 = vmatprep.subr.mxu0 0.0
    %484 = vmatpush1.msra.mxu0 0.0
    %485 = vmatprep.subr.mxu0 0.0
    %486 = vmatpush1.msra.mxu0 0.0
    %487 = vmatprep.mubr.f32.mxu0 0.0
    %v488 = vand.u32 %v43, 4294901760
    %v489 = vsub.f32 %v43, %v488
    %v490 = vand.u32 %v489, 4294901760
    %491 = vmatmul.mubr.f32.gmra.mrb[0].mxu0 %v490
    %v492 = vpop.f32.mrb[0].mxu0
    %v493 = vadd.f32 %v404, %v492
    %v494 = vpop.f32.mrb[0].mxu0
    %495 = vdwg.mxu0
    %496 = vmatprep.subr.mxu0 0.0
    %v497 = vand.u32 %v45, 4294901760
    %v498 = vsub.f32 %v45, %v497
    %v499 = vand.u32 %v498, 4294901760
    %500 = vmatpush1.msra.mxu0 %v499
    %501 = vmatprep.subr.mxu0 0.0
    %v502 = vand.u32 %v46, 4294901760
    %v503 = vsub.f32 %v46, %v502
    %v504 = vand.u32 %v503, 4294901760
    %505 = vmatpush1.msra.mxu0 %v504
    %506 = vmatprep.subr.mxu0 0.0
    %v507 = vand.u32 %v47, 4294901760
    %v508 = vsub.f32 %v47, %v507
    %v509 = vand.u32 %v508, 4294901760
    %510 = vmatpush1.msra.mxu0 %v509
    %511 = vmatprep.subr.mxu0 0.0
    %v512 = vand.u32 %v48, 4294901760
    %v513 = vsub.f32 %v48, %v512
    %v514 = vand.u32 %v513, 4294901760
    %515 = vmatpush1.msra.mxu0 %v514
    %516 = vmatprep.subr.mxu0 0.0
    %v517 = vand.u32 %v49, 4294901760
    %v518 = vsub.f32 %v49, %v517
    %v519 = vand.u32 %v518, 4294901760
    %520 = vmatpush1.msra.mxu0 %v519
    %521 = vmatprep.subr.mxu0 0.0
    %v522 = vand.u32 %v50, 4294901760
    %v523 = vsub.f32 %v50, %v522
    %v524 = vand.u32 %v523, 4294901760
    %525 = vmatpush1.msra.mxu0 %v524
    %526 = vmatprep.subr.mxu0 0.0
    %v527 = vand.u32 %v51, 4294901760
    %v528 = vsub.f32 %v51, %v527
    %v529 = vand.u32 %v528, 4294901760
    %530 = vmatpush1.msra.mxu0 %v529
    %531 = vmatprep.subr.mxu0 0.0
    %v532 = vand.u32 %v52, 4294901760
    %v533 = vsub.f32 %v52, %v532
    %v534 = vand.u32 %v533, 4294901760
    %535 = vmatpush1.msra.mxu0 %v534
    %536 = vmatprep.subr.mxu0 0.0
    %v537 = vand.u32 %v53, 4294901760
    %v538 = vsub.f32 %v53, %v537
    %v539 = vand.u32 %v538, 4294901760
    %540 = vmatpush1.msra.mxu0 %v539
    %541 = vmatprep.subr.mxu0 0.0
    %v542 = vand.u32 %v54, 4294901760
    %v543 = vsub.f32 %v54, %v542
    %v544 = vand.u32 %v543, 4294901760
    %545 = vmatpush1.msra.mxu0 %v544
    %546 = vmatprep.subr.mxu0 0.0
    %v547 = vand.u32 %v55, 4294901760
    %v548 = vsub.f32 %v55, %v547
    %v549 = vand.u32 %v548, 4294901760
    %550 = vmatpush1.msra.mxu0 %v549
    %551 = vmatprep.subr.mxu0 0.0
    %v552 = vand.u32 %v56, 4294901760
    %v553 = vsub.f32 %v56, %v552
    %v554 = vand.u32 %v553, 4294901760
    %555 = vmatpush1.msra.mxu0 %v554
    %556 = vmatprep.subr.mxu0 0.0
    %v557 = vand.u32 %v57, 4294901760
    %v558 = vsub.f32 %v57, %v557
    %v559 = vand.u32 %v558, 4294901760
    %560 = vmatpush1.msra.mxu0 %v559
    %561 = vmatprep.subr.mxu0 0.0
    %v562 = vand.u32 %v58, 4294901760
    %v563 = vsub.f32 %v58, %v562
    %v564 = vand.u32 %v563, 4294901760
    %565 = vmatpush1.msra.mxu0 %v564
    %566 = vmatprep.subr.mxu0 0.0
    %v567 = vand.u32 %v59, 4294901760
    %v568 = vsub.f32 %v59, %v567
    %v569 = vand.u32 %v568, 4294901760
    %570 = vmatpush1.msra.mxu0 %v569
    %571 = vmatprep.subr.mxu0 0.0
    %v572 = vand.u32 %v60, 4294901760
    %v573 = vsub.f32 %v60, %v572
    %v574 = vand.u32 %v573, 4294901760
    %575 = vmatpush1.msra.mxu0 %v574
    %576 = vmatprep.subr.mxu0 0.0
    %577 = vmatpush1.msra.mxu0 0.0
    %578 = vmatprep.subr.mxu0 0.0
    %579 = vmatpush1.msra.mxu0 0.0
    %580 = vmatprep.subr.mxu0 0.0
    %581 = vmatpush1.msra.mxu0 0.0
    %582 = vmatprep.subr.mxu0 0.0
    %583 = vmatpush1.msra.mxu0 0.0
    %584 = vmatprep.subr.mxu0 0.0
    %585 = vmatpush1.msra.mxu0 0.0
    %586 = vmatprep.subr.mxu0 0.0
    %587 = vmatpush1.msra.mxu0 0.0
    %588 = vmatprep.subr.mxu0 0.0
    %589 = vmatpush1.msra.mxu0 0.0
    %590 = vmatprep.subr.mxu0 0.0
    %591 = vmatpush1.msra.mxu0 0.0
    %592 = vmatprep.subr.mxu0 0.0
    %593 = vmatpush1.msra.mxu0 0.0
    %594 = vmatprep.subr.mxu0 0.0
    %595 = vmatpush1.msra.mxu0 0.0
    %596 = vmatprep.subr.mxu0 0.0
    %597 = vmatpush1.msra.mxu0 0.0
    %598 = vmatprep.subr.mxu0 0.0
    %599 = vmatpush1.msra.mxu0 0.0
    %600 = vmatprep.subr.mxu0 0.0
    %601 = vmatpush1.msra.mxu0 0.0
    %602 = vmatprep.subr.mxu0 0.0
    %603 = vmatpush1.msra.mxu0 0.0
    %604 = vmatprep.subr.mxu0 0.0
    %605 = vmatpush1.msra.mxu0 0.0
    %606 = vmatprep.subr.mxu0 0.0
    %607 = vmatpush1.msra.mxu0 0.0
    %608 = vmatprep.mubr.f32.mxu0 0.0
    %v609 = vand.u32 %v43, 4294901760
    %610 = vmatmul.mubr.f32.gmra.mrb[0].mxu0 %v609
    %v611 = vpop.f32.mrb[0].mxu0
    %v612 = vadd.f32 %v493, %v611
    %v613 = vpop.f32.mrb[0].mxu0
    %614 = vdwg.mxu0
    %615 = vmatprep.subr.mxu0 0.0
    %v616 = vand.u32 %v45, 4294901760
    %617 = vmatpush1.msra.mxu0 %v616
    %618 = vmatprep.subr.mxu0 0.0
    %v619 = vand.u32 %v46, 4294901760
    %620 = vmatpush1.msra.mxu0 %v619
    %621 = vmatprep.subr.mxu0 0.0
    %v622 = vand.u32 %v47, 4294901760
    %623 = vmatpush1.msra.mxu0 %v622
    %624 = vmatprep.subr.mxu0 0.0
    %v625 = vand.u32 %v48, 4294901760
    %626 = vmatpush1.msra.mxu0 %v625
    %627 = vmatprep.subr.mxu0 0.0
    %v628 = vand.u32 %v49, 4294901760
    %629 = vmatpush1.msra.mxu0 %v628
    %630 = vmatprep.subr.mxu0 0.0
    %v631 = vand.u32 %v50, 4294901760
    %632 = vmatpush1.msra.mxu0 %v631
    %633 = vmatprep.subr.mxu0 0.0
    %v634 = vand.u32 %v51, 4294901760
    %635 = vmatpush1.msra.mxu0 %v634
    %636 = vmatprep.subr.mxu0 0.0
    %v637 = vand.u32 %v52, 4294901760
    %638 = vmatpush1.msra.mxu0 %v637
    %639 = vmatprep.subr.mxu0 0.0
    %v640 = vand.u32 %v53, 4294901760
    %641 = vmatpush1.msra.mxu0 %v640
    %642 = vmatprep.subr.mxu0 0.0
    %v643 = vand.u32 %v54, 4294901760
    %644 = vmatpush1.msra.mxu0 %v643
    %645 = vmatprep.subr.mxu0 0.0
    %v646 = vand.u32 %v55, 4294901760
    %647 = vmatpush1.msra.mxu0 %v646
    %648 = vmatprep.subr.mxu0 0.0
    %v649 = vand.u32 %v56, 4294901760
    %650 = vmatpush1.msra.mxu0 %v649
    %651 = vmatprep.subr.mxu0 0.0
    %v652 = vand.u32 %v57, 4294901760
    %653 = vmatpush1.msra.mxu0 %v652
    %654 = vmatprep.subr.mxu0 0.0
    %v655 = vand.u32 %v58, 4294901760
    %656 = vmatpush1.msra.mxu0 %v655
    %657 = vmatprep.subr.mxu0 0.0
    %v658 = vand.u32 %v59, 4294901760
    %659 = vmatpush1.msra.mxu0 %v658
    %660 = vmatprep.subr.mxu0 0.0
    %v661 = vand.u32 %v60, 4294901760
    %662 = vmatpush1.msra.mxu0 %v661
    %663 = vmatprep.subr.mxu0 0.0
    %664 = vmatpush1.msra.mxu0 0.0
    %665 = vmatprep.subr.mxu0 0.0
    %666 = vmatpush1.msra.mxu0 0.0
    %667 = vmatprep.subr.mxu0 0.0
    %668 = vmatpush1.msra.mxu0 0.0
    %669 = vmatprep.subr.mxu0 0.0
    %670 = vmatpush1.msra.mxu0 0.0
    %671 = vmatprep.subr.mxu0 0.0
    %672 = vmatpush1.msra.mxu0 0.0
    %673 = vmatprep.subr.mxu0 0.0
    %674 = vmatpush1.msra.mxu0 0.0
    %675 = vmatprep.subr.mxu0 0.0
    %676 = vmatpush1.msra.mxu0 0.0
    %677 = vmatprep.subr.mxu0 0.0
    %678 = vmatpush1.msra.mxu0 0.0
    %679 = vmatprep.subr.mxu0 0.0
    %680 = vmatpush1.msra.mxu0 0.0
    %681 = vmatprep.subr.mxu0 0.0
    %682 = vmatpush1.msra.mxu0 0.0
    %683 = vmatprep.subr.mxu0 0.0
    %684 = vmatpush1.msra.mxu0 0.0
    %685 = vmatprep.subr.mxu0 0.0
    %686 = vmatpush1.msra.mxu0 0.0
    %687 = vmatprep.subr.mxu0 0.0
    %688 = vmatpush1.msra.mxu0 0.0
    %689 = vmatprep.subr.mxu0 0.0
    %690 = vmatpush1.msra.mxu0 0.0
    %691 = vmatprep.subr.mxu0 0.0
    %692 = vmatpush1.msra.mxu0 0.0
    %693 = vmatprep.subr.mxu0 0.0
    %694 = vmatpush1.msra.mxu0 0.0
    %695 = vmatprep.mubr.f32.mxu0 0.0
    %v696 = vand.u32 %v43, 4294901760
    %697 = vmatmul.mubr.f32.gmra.mrb[0].mxu0 %v696
    %v698 = vpop.f32.mrb[0].mxu0
    %v699 = vadd.f32 %v612, %v698
    %v700 = vpop.f32.mrb[0].mxu0
    %701 = vdwg.mxu0
    %v702 = vadd.f32 %v44, %v699
    %703 = vst [vmem:[#allocation5] sm:$0xff] %v702
    // Predicated region
    $region22: #{tpu_custom_call.1} parent=1 // pred_check
      %p704 = pneg %p29
    $region23: #{tpu_custom_call.1} parent=1 // pred_check_branch
      %706 = sbr.rel (%p704) target = $region25
    $region24: #{tpu_custom_call.1} parent=1 // pred_region
      %v707 = vld [vmem:[%s1] sm:$0xff]
      %v708 = vld [vmem:[#allocation5] sm:$0xff]
      %710 = vset.pattern.permute.xlu0 0
      %711 = vperm.xlu0 %710, %v707
      %v712 = vpop.permute.xlu0 %711
      %v714 = vrcp.pop %v712
      %v715 = vmul.f32 %v708, %v714
      %716 = vst [vmem:[#allocation5] sm:$0xff] %v715
    $region25: #{tpu_custom_call.1} parent=1 // pred_fallthru
      _
    // Predicated region
    $region26: #{tpu_custom_call.1} parent=1 // pred_check
      _
    $region27: #{tpu_custom_call.1} parent=1 // pred_check_branch
      %718 = sbr.rel (0) target = $region29
    $region28: #{tpu_custom_call.1} parent=1 // pred_region
      %s720 = ssub.s32 128, 128
      %721 = vsyncadd [#allocation4], %s720
      %s723 = sshll.u32 [#allocation5], 4
      %s724 = int_to_ptr.vmem [resolvable:$true] %s723
      %726 = dma.vmem_to_hbm [thread:$0]  %s724, 128, %s3, [#allocation4]
    $region29: #{tpu_custom_call.1} parent=1 // pred_fallthru
      _
    // Predicated region
    $region30: #{tpu_custom_call.1} parent=1 // pred_check
      _
    $region31: #{tpu_custom_call.1} parent=1 // pred_check_branch
      %728 = sbr.rel (0) target = $region33
    $region32: #{tpu_custom_call.1} parent=1 // pred_region
      %729 = dma.done [#allocation4], 128
    $region33: #{tpu_custom_call.1} parent=1 // pred_fallthru
      _
    %730 = vsyncpa [#allocation3], 1
    %731 = vsyncpa [#allocation4], 1

</llo_original>
